<compile_context>
chip_gen: v5e
topology: v5e:2x2
jax: 0.10.0
libtpu: 0.0.40
codegen_flags: <defaults>
</compile_context>

<pallas_src>
import functools
import math

import jax
import jax.numpy as jnp
from jax.experimental import pallas as pl
from jax.experimental.pallas import tpu as pltpu


def make_positional_encoding_table(max_len, d_model, dtype=jnp.float32):
    """Builds the same buffer the torch module registers: (max_len, 1, d_model)."""
    position = jnp.arange(max_len, dtype=jnp.float32)[:, None]
    div_term = jnp.exp(
        jnp.arange(0, d_model, 2, dtype=jnp.float32) * (-math.log(10000.0) / d_model)
    )
    angles = position * div_term                       # (max_len, d_model // 2)
    pe = jnp.zeros((max_len, d_model), jnp.float32)
    pe = pe.at[:, 0::2].set(jnp.sin(angles))
    pe = pe.at[:, 1::2].set(jnp.cos(angles))
    return pe[:, None, :].astype(dtype)                # (max_len, 1, d_model)


def _dropout_threshold(p: float) -> int:
    """uint32 threshold s.t. P(bits >= threshold) = 1 - p."""
    return min(int(round(p * 2.0 ** 32)), 2 ** 32 - 1)


def _pe_add_kernel(x_ref, pe_ref, o_ref):
    """Eval mode: out = x + pe (dropout is identity). pe broadcasts over batch."""
    y = x_ref[...].astype(jnp.float32) + pe_ref[...].astype(jnp.float32)
    o_ref[...] = y.astype(o_ref.dtype)


def _make_pe_dropout_kernel(p: float):
    """Training mode: out = inverted-dropout(x + pe) via integer-threshold mask."""
    scale = 1.0 / (1.0 - p)
    threshold = _dropout_threshold(p)

    def kernel(x_ref, pe_ref, bits_ref, o_ref):
        y = x_ref[...].astype(jnp.float32) + pe_ref[...].astype(jnp.float32)
        keep = bits_ref[...] >= jnp.uint32(threshold)      # P(keep) = 1 - p
        o_ref[...] = jnp.where(keep, y * scale, 0.0).astype(o_ref.dtype)

    return kernel


def _pick_seq_tile(seq_len: int, target: int = 256) -> int:
    """Largest tile <= target that evenly divides seq_len (big tiles amortize
    the ~0.35us per-grid-step overhead; 256+ rows ~ roofline for mem-bound)."""
    if seq_len <= target:
        return seq_len
    for ts in range(target, 0, -1):
        if seq_len % ts == 0:
            return ts
    return seq_len


@functools.partial(jax.jit, static_argnames=("p", "training"))
def positional_encoding_forward(x, pe, bits=None, *, p=0.1, training=False):
    """x: (S, B, D); pe: (max_len, 1, D); bits: (S, B, D) uint32 (training only)."""
    if not (0.0 <= p < 1.0):
        raise ValueError("dropout p must be in [0, 1)")
    S, B, D = x.shape
    pe_s = jax.lax.slice(pe, (0, 0, 0), (S, 1, D))         # == self.pe[:x.size(0), :]

    ts = _pick_seq_tile(S)
    grid = (S // ts,)

    x_spec = pl.BlockSpec((ts, B, D), lambda i: (i, 0, 0))
    pe_spec = pl.BlockSpec((ts, 1, D), lambda i: (i, 0, 0))
    bits_spec = pl.BlockSpec((ts, B, D), lambda i: (i, 0, 0))
    out_spec = pl.BlockSpec((ts, B, D), lambda i: (i, 0, 0))

    itemsize = jnp.dtype(x.dtype).itemsize
    bytes_accessed = 2 * S * B * D * itemsize + S * D * 4   # x in + y out + pe
    flops = S * B * D                                       # the add
    if training:
        bytes_accessed += S * B * D * 4                     # uint32 mask stream
        flops += 2 * S * B * D                              # compare + scale/select

    call_kwargs = dict(
        out_shape=jax.ShapeDtypeStruct((S, B, D), x.dtype),
        grid=grid,
        out_specs=out_spec,
        cost_estimate=pl.CostEstimate(
            flops=flops, transcendentals=0, bytes_accessed=bytes_accessed
        ),
    )

    # TPU-only compiler knobs (skipped under the CPU interpret harness).
    if jax.default_backend() == "tpu":
        block_bytes = ts * B * D * itemsize
        vmem_need = 2 * (2 * block_bytes) + 2 * ts * D * 4  # dbl-buffered x/out + pe
        if training:
            vmem_need += 2 * ts * B * D * 4                 # dbl-buffered mask tile
        call_kwargs["compiler_params"] = pltpu.CompilerParams(
            dimension_semantics=("parallel",),              # shard grid across TCs (v7x)
            vmem_limit_bytes=int(min(max(4 * vmem_need, 4 << 20), 64 << 20)),
        )

    if training:
        if bits is None:
            raise ValueError("training=True requires a uint32 `bits` array of x.shape")
        return pl.pallas_call(
            _make_pe_dropout_kernel(p),
            in_specs=[x_spec, pe_spec, bits_spec],
            **call_kwargs,
        )(x, pe_s, bits)

    return pl.pallas_call(
        _pe_add_kernel,
        in_specs=[x_spec, pe_spec],
        **call_kwargs,
    )(x, pe_s)


if __name__ == "__main__":
    key = jax.random.PRNGKey(0)
    k_x, k_bits = jax.random.split(key)

    # (seq_len, batch, d_model) — d_model kept lane-dense (multiple of 128).
    seq_len, batch, d_model, max_len, p = 16, 4, 128, 64, 0.1
    x = jax.random.normal(k_x, (seq_len, batch, d_model), jnp.float32)
    pe = make_positional_encoding_table(max_len, d_model)

    # Eval mode (dropout = identity): verify against the pure-JAX reference.
    y_eval = positional_encoding_forward(x, pe, p=p, training=False)
    jax.block_until_ready(y_eval)
    ref = x + pe[:seq_len]
    assert y_eval.shape == x.shape
    assert jnp.allclose(y_eval, ref, atol=1e-6, rtol=1e-6)

    # Training mode: inverted dropout from a deterministic host-generated mask.
    bits = jax.random.bits(k_bits, (seq_len, batch, d_model), jnp.uint32)
    y_train = positional_encoding_forward(x, pe, bits, p=p, training=True)
    jax.block_until_ready(y_train)
    keep = bits >= jnp.uint32(_dropout_threshold(p))
    ref_train = jnp.where(keep, ref / (1.0 - p), 0.0)
    assert y_train.shape == x.shape
    assert jnp.allclose(y_train, ref_train, atol=1e-5, rtol=1e-5)

    print("KERNEL_OK")
</pallas_src>

<mosaic_0001>
module attributes {stable_mosaic.version = 11 : i64} {
  func.func @_pe_add_kernel(%arg0: i32, %arg1: memref<16x4x128xf32, #tpu.memory_space<vmem>>, %arg2: memref<16x1x128xf32, #tpu.memory_space<vmem>>, %arg3: memref<16x4x128xf32, #tpu.memory_space<vmem>>) attributes {dimension_semantics = [#tpu.dimension_semantics<arbitrary>], iteration_bounds = array<i64: 1>, scalar_prefetch = 0 : i64, scratch_operands = 0 : i64, tpu.core_type = #tpu.core_type<tc>, window_params = [{transform_indices = @transform_0, window_bounds = array<i64: 16, 4, 128>}, {transform_indices = @transform_1, window_bounds = array<i64: 16, 1, 128>}, {transform_indices = @transform_2, window_bounds = array<i64: 16, 4, 128>}]} {
    %c0 = arith.constant 0 : index
    %c0_0 = arith.constant 0 : index
    %c0_1 = arith.constant 0 : index
    %0 = vector.load %arg1[%c0, %c0_0, %c0_1] : memref<16x4x128xf32, #tpu.memory_space<vmem>>, vector<16x4x128xf32>
    %c0_2 = arith.constant 0 : index
    %c0_3 = arith.constant 0 : index
    %c0_4 = arith.constant 0 : index
    %1 = vector.load %arg2[%c0_2, %c0_3, %c0_4] : memref<16x1x128xf32, #tpu.memory_space<vmem>>, vector<16x1x128xf32>
    %2 = vector.broadcast %1 : vector<16x1x128xf32> to vector<16x4x128xf32>
    %3 = arith.addf %0, %2 : vector<16x4x128xf32>
    %c0_5 = arith.constant 0 : index
    %c0_6 = arith.constant 0 : index
    %c0_7 = arith.constant 0 : index
    %4 = vector.load %arg3[%c0_5, %c0_6, %c0_7] : memref<16x4x128xf32, #tpu.memory_space<vmem>>, vector<16x4x128xf32>
    tpu.vector_store %arg3[%c0_5, %c0_6, %c0_7], %3 {strides = array<i32>} : memref<16x4x128xf32, #tpu.memory_space<vmem>>, vector<16x4x128xf32>,
    return
  }
  func.func @transform_0(%arg0: i32) -> (i32, i32, i32) {
    %c0_i32 = arith.constant 0 : i32
    %c0_i32_0 = arith.constant 0 : i32
    %c0_i32_1 = arith.constant 0 : i32
    return %arg0, %c0_i32, %c0_i32_0 : i32, i32, i32
  }
  func.func @transform_1(%arg0: i32) -> (i32, i32, i32) {
    %c0_i32 = arith.constant 0 : i32
    %c0_i32_0 = arith.constant 0 : i32
    %c0_i32_1 = arith.constant 0 : i32
    return %arg0, %c0_i32, %c0_i32_0 : i32, i32, i32
  }
  func.func @transform_2(%arg0: i32) -> (i32, i32, i32) {
    %c0_i32 = arith.constant 0 : i32
    %c0_i32_0 = arith.constant 0 : i32
    %c0_i32_1 = arith.constant 0 : i32
    return %arg0, %c0_i32, %c0_i32_0 : i32, i32, i32
  }
}

</mosaic_0001>

<llo_original>
// kernel: positional_encoding_forward.1
$region0: #{positional_encoding_forward.1}
  #allocation0 [shape = 'u32[]', space=smem, size = 0x4, offset = 0x4, fixed_abs, tag = 'smem constant byte address 0x4 - core index']
  #allocation1 [shape = 'u32[72,128]{1,0:T(1,128)}', space=vmem, size = 0x9000, scoped, tag = 'internal scratch']
  %s0 = inlined_call_operand.hbm [shape: f32[16,4,128], index: 0, kind: input, shape index: {}]
  %s1 = inlined_call_operand.vmem [shape: f32[16,1,128], index: 1, kind: input, shape index: {}]
  %s2 = inlined_call_operand.hbm [shape: f32[16,4,128], index: 2, kind: output, shape index: {}]
  %s3 = sld [smem:[#allocation0]]
  $region22: #{positional_encoding_forward.1} parent=0
    _
  %s5 = ssub.s32 1, %s3
  %s6 = scalar_select 0, %s5, %s3
  $region1: #{positional_encoding_forward.1} parent=0
    #allocation2 [shape = 'u8[32768]{0}', space=vmem, size = 0x8000, scoped, tag = 'input window, operand 0, single buffered']
    #allocation3 [shape = 's32[1]{0}', space=sflag, size = 0x4, scoped, tag = 'scoped memory for positional_encoding_forward.1']
    #allocation4 [shape = 's32[1]{0}', space=sflag, size = 0x4, scoped, tag = 'scoped memory for positional_encoding_forward.1']
    #allocation5 [shape = 'u8[32768]{0}', space=vmem, size = 0x8000, scoped, tag = 'output window, operand 0, single buffered']
    %7 = vsyncpa [#allocation3], 0
    %8 = vsyncpa [#allocation4], 0
    // Predicated region
    $region2: #{positional_encoding_forward.1} parent=1 // pred_check
      _
    $region3: #{positional_encoding_forward.1} parent=1 // pred_check_branch
      %10 = sbr.rel (0) target = $region5
    $region4: #{positional_encoding_forward.1} parent=1 // pred_region
      %12 = vsyncadd [#allocation3], 0
      %s13 = sshll.u32 %s0, 4
      %s14 = int_to_ptr.hbm [resolvable:$true] %s13
      %s15 = sshll.u32 [#allocation2], 4
      %s16 = int_to_ptr.vmem [resolvable:$true] %s15
      %21 = dma.hbm_to_vmem [thread:$0]  %s14, 1024, %s16, [#allocation3], 64, 64, 4
    $region5: #{positional_encoding_forward.1} parent=1 // pred_fallthru
      _
    // Predicated region
    $region6: #{positional_encoding_forward.1} parent=1 // pred_check
      _
    $region7: #{positional_encoding_forward.1} parent=1 // pred_check_branch
      %23 = sbr.rel (0) target = $region9
    $region8: #{positional_encoding_forward.1} parent=1 // pred_region
      _
    $region9: #{positional_encoding_forward.1} parent=1 // pred_fallthru
      _
    // Predicated region
    $region10: #{positional_encoding_forward.1} parent=1 // pred_check
      _
    $region11: #{positional_encoding_forward.1} parent=1 // pred_check_branch
      %25 = sbr.rel (0) target = $region13
    $region12: #{positional_encoding_forward.1} parent=1 // pred_region
      %27 = dma.done [#allocation3], 1024
    $region13: #{positional_encoding_forward.1} parent=1 // pred_fallthru
      _
    %v28 = vld [vmem:[#allocation2] sm:$0xf]
    %v29 = vld [vmem:[#allocation2 + $0x4] sm:$0xf]
    %v30 = vld [vmem:[#allocation2 + $0x8] sm:$0xf]
    %v31 = vld [vmem:[#allocation2 + $0xc] sm:$0xf]
    %v32 = vld [vmem:[#allocation2 + $0x10] sm:$0xf]
    %v33 = vld [vmem:[#allocation2 + $0x14] sm:$0xf]
    %v34 = vld [vmem:[#allocation2 + $0x18] sm:$0xf]
    %v35 = vld [vmem:[#allocation2 + $0x1c] sm:$0xf]
    %v36 = vld [vmem:[#allocation2 + $0x20] sm:$0xf]
    %v37 = vld [vmem:[#allocation2 + $0x24] sm:$0xf]
    %v38 = vld [vmem:[#allocation2 + $0x28] sm:$0xf]
    %v39 = vld [vmem:[#allocation2 + $0x2c] sm:$0xf]
    %v40 = vld [vmem:[#allocation2 + $0x30] sm:$0xf]
    %v41 = vld [vmem:[#allocation2 + $0x34] sm:$0xf]
    %v42 = vld [vmem:[#allocation2 + $0x38] sm:$0xf]
    %v43 = vld [vmem:[#allocation2 + $0x3c] sm:$0xf]
    %v44 = vld [vmem:[%s1] sm:$0x1]
    %v45 = vld [vmem:[%s1 + $0x1] sm:$0x1]
    %v46 = vld [vmem:[%s1 + $0x2] sm:$0x1]
    %v47 = vld [vmem:[%s1 + $0x3] sm:$0x1]
    %v48 = vld [vmem:[%s1 + $0x4] sm:$0x1]
    %v49 = vld [vmem:[%s1 + $0x5] sm:$0x1]
    %v50 = vld [vmem:[%s1 + $0x6] sm:$0x1]
    %v51 = vld [vmem:[%s1 + $0x7] sm:$0x1]
    %v52 = vld [vmem:[%s1 + $0x8] sm:$0x1]
    %v53 = vld [vmem:[%s1 + $0x9] sm:$0x1]
    %v54 = vld [vmem:[%s1 + $0xa] sm:$0x1]
    %v55 = vld [vmem:[%s1 + $0xb] sm:$0x1]
    %v56 = vld [vmem:[%s1 + $0xc] sm:$0x1]
    %v57 = vld [vmem:[%s1 + $0xd] sm:$0x1]
    %v58 = vld [vmem:[%s1 + $0xe] sm:$0x1]
    %v59 = vld [vmem:[%s1 + $0xf] sm:$0x1]
    %v76 = vperm.slane %v44, 0
    %v77 = vperm.slane %v45, 0
    %v78 = vperm.slane %v46, 0
    %v79 = vperm.slane %v47, 0
    %v80 = vperm.slane %v48, 0
    %v81 = vperm.slane %v49, 0
    %v82 = vperm.slane %v50, 0
    %v83 = vperm.slane %v51, 0
    %v84 = vperm.slane %v52, 0
    %v85 = vperm.slane %v53, 0
    %v86 = vperm.slane %v54, 0
    %v87 = vperm.slane %v55, 0
    %v88 = vperm.slane %v56, 0
    %v89 = vperm.slane %v57, 0
    %v90 = vperm.slane %v58, 0
    %v91 = vperm.slane %v59, 0
    %v108 = vadd.f32 %v28, %v76
    %v109 = vadd.f32 %v29, %v77
    %v110 = vadd.f32 %v30, %v78
    %v111 = vadd.f32 %v31, %v79
    %v112 = vadd.f32 %v32, %v80
    %v113 = vadd.f32 %v33, %v81
    %v114 = vadd.f32 %v34, %v82
    %v115 = vadd.f32 %v35, %v83
    %v116 = vadd.f32 %v36, %v84
    %v117 = vadd.f32 %v37, %v85
    %v118 = vadd.f32 %v38, %v86
    %v119 = vadd.f32 %v39, %v87
    %v120 = vadd.f32 %v40, %v88
    %v121 = vadd.f32 %v41, %v89
    %v122 = vadd.f32 %v42, %v90
    %v123 = vadd.f32 %v43, %v91
    %124 = vst [vmem:[#allocation5] sm:$0xf] %v108
    %125 = vst [vmem:[#allocation5 + $0x4] sm:$0xf] %v109
    %126 = vst [vmem:[#allocation5 + $0x8] sm:$0xf] %v110
    %127 = vst [vmem:[#allocation5 + $0xc] sm:$0xf] %v111
    %128 = vst [vmem:[#allocation5 + $0x10] sm:$0xf] %v112
    %129 = vst [vmem:[#allocation5 + $0x14] sm:$0xf] %v113
    %130 = vst [vmem:[#allocation5 + $0x18] sm:$0xf] %v114
    %131 = vst [vmem:[#allocation5 + $0x1c] sm:$0xf] %v115
    %132 = vst [vmem:[#allocation5 + $0x20] sm:$0xf] %v116
    %133 = vst [vmem:[#allocation5 + $0x24] sm:$0xf] %v117
    %134 = vst [vmem:[#allocation5 + $0x28] sm:$0xf] %v118
    %135 = vst [vmem:[#allocation5 + $0x2c] sm:$0xf] %v119
    %136 = vst [vmem:[#allocation5 + $0x30] sm:$0xf] %v120
    %137 = vst [vmem:[#allocation5 + $0x34] sm:$0xf] %v121
    %138 = vst [vmem:[#allocation5 + $0x38] sm:$0xf] %v122
    %139 = vst [vmem:[#allocation5 + $0x3c] sm:$0xf] %v123
    // Predicated region
    $region14: #{positional_encoding_forward.1} parent=1 // pred_check
      _
    $region15: #{positional_encoding_forward.1} parent=1 // pred_check_branch
      %141 = sbr.rel (0) target = $region17
    $region16: #{positional_encoding_forward.1} parent=1 // pred_region
      %143 = vsyncadd [#allocation4], 0
      %s144 = sshll.u32 [#allocation5], 4
      %s145 = int_to_ptr.vmem [resolvable:$true] %s144
      %s146 = sshll.u32 %s2, 4
      %s147 = int_to_ptr.hbm [resolvable:$true] %s146
      %152 = dma.vmem_to_hbm [thread:$0]  %s145, 1024, %s147, [#allocation4], 64, 64, 4
    $region17: #{positional_encoding_forward.1} parent=1 // pred_fallthru
      _
    // Predicated region
    $region18: #{positional_encoding_forward.1} parent=1 // pred_check
      _
    $region19: #{positional_encoding_forward.1} parent=1 // pred_check_branch
      %154 = sbr.rel (0) target = $region21
    $region20: #{positional_encoding_forward.1} parent=1 // pred_region
      %156 = dma.done [#allocation4], 1024
    $region21: #{positional_encoding_forward.1} parent=1 // pred_fallthru
      _
    %157 = vsyncpa [#allocation3], 1
    %158 = vsyncpa [#allocation4], 1

</llo_original>
